<compile_context>
chip_gen: v7x
topology: tpu7x:2x2x1
jax: 0.10.0
libtpu: 0.0.40
codegen_flags: <defaults>
</compile_context>

<pallas_src>
import functools

import jax
import jax.numpy as jnp
from jax import lax
from jax.experimental import pallas as pl
from jax.experimental.pallas import tpu as pltpu


def _round_up(x, m):
    return ((x + m - 1) // m) * m


def _l2_normalize_rows(v):
    # torch.nn.functional.normalize(p=2, dim=1): v / max(||v||_2, 1e-12)
    # == v * rsqrt(max(sumsq, 1e-24)); rsqrt runs on the EUP (free-ish slot).
    sumsq = jnp.sum(v * v, axis=1, keepdims=True)
    inv = lax.rsqrt(jnp.maximum(sumsq, 1e-24))
    return v * inv


def hlss_kernel(x_ref, wbb_ref, bbb_ref, wp_ref, bp_ref, out_ref, acc_ref,
                *, d_vis, d_proj):
    """Grid = (batch tiles [parallel], K tiles over F_in [arbitrary])."""
    k = pl.program_id(1)

    @pl.when(k == 0)
    def _init():
        acc_ref[...] = jnp.zeros_like(acc_ref)

    # In-kernel f32 -> bf16 cast of the input tile, then the fused-backbone
    # partial matmul for this K slab (one wide (tile_k, Dv+Dt) MXU pass).
    x = x_ref[...].astype(jnp.bfloat16)
    acc_ref[...] += jnp.dot(x, wbb_ref[...],
                            preferred_element_type=jnp.float32)

    @pl.when(k == pl.num_programs(1) - 1)
    def _finalize():
        # Bias + ReLU in f32 on the fully reduced backbone activations.
        bb = jnp.maximum(acc_ref[...] + bbb_ref[...], 0.0)
        vis = bb[:, :d_vis]                         # 128-aligned static split
        txt = bb[:, d_vis:]

        # Fused projection heads: one (Dt, 3*Dp) bf16 matmul, f32 accum.
        proj = jnp.dot(txt.astype(jnp.bfloat16), wp_ref[...],
                       preferred_element_type=jnp.float32) + bp_ref[...]

        # Single fused output block; every store is an unmasked 128-lane slab.
        out_ref[:, :d_vis] = _l2_normalize_rows(vis)
        out_ref[:, d_vis:d_vis + d_proj] = _l2_normalize_rows(
            proj[:, :d_proj])
        out_ref[:, d_vis + d_proj:d_vis + 2 * d_proj] = _l2_normalize_rows(
            proj[:, d_proj:2 * d_proj])
        out_ref[:, d_vis + 2 * d_proj:] = _l2_normalize_rows(
            proj[:, 2 * d_proj:])


def pack_params(params):
    """Concatenate per-head weights (2 fused matmuls) and pad dims to 128."""
    wv, bv, wt, bt, w1, b1, w2, b2, w3, b3 = params
    d_vis, d_txt, d_proj = wv.shape[1], wt.shape[1], w1.shape[1]
    d_vis_p = _round_up(d_vis, 128)
    d_txt_p = _round_up(d_txt, 128)
    d_proj_p = _round_up(d_proj, 128)

    def pad_cols(w, n):
        return jnp.pad(w, ((0, 0), (0, n - w.shape[1])))

    def pad_rows(w, n):
        return jnp.pad(w, ((0, n - w.shape[0]), (0, 0)))

    wbb = jnp.concatenate([pad_cols(wv, d_vis_p), pad_cols(wt, d_txt_p)],
                          axis=1).astype(jnp.bfloat16)           # (F, Dv+Dt)
    bbb = jnp.concatenate([pad_cols(bv, d_vis_p), pad_cols(bt, d_txt_p)],
                          axis=1).astype(jnp.float32)            # (1, Dv+Dt)
    wp = jnp.concatenate(
        [pad_cols(pad_rows(w1, d_txt_p), d_proj_p),
         pad_cols(pad_rows(w2, d_txt_p), d_proj_p),
         pad_cols(pad_rows(w3, d_txt_p), d_proj_p)],
        axis=1).astype(jnp.bfloat16)                             # (Dt, 3*Dp)
    bp = jnp.concatenate(
        [pad_cols(b1, d_proj_p), pad_cols(b2, d_proj_p),
         pad_cols(b3, d_proj_p)], axis=1).astype(jnp.float32)    # (1, 3*Dp)

    dims = dict(d_vis=d_vis, d_txt=d_txt, d_proj=d_proj,
                d_vis_p=d_vis_p, d_txt_p=d_txt_p, d_proj_p=d_proj_p)
    return (wbb, bbb, wp, bp), dims


def hlss_granular_kl_forward(x_nchw, packed, dims, *,
                             max_tile_b=512, max_tile_k=2048):
    """x_nchw: (B, C, H, W) f32.  Returns 4 arrays of shape (B, 1, D)."""
    wbb, bbb, wp, bp = packed
    B = x_nchw.shape[0]
    x_flat = x_nchw.reshape(B, -1)                 # stays f32 (cast in kernel)
    f_in = x_flat.shape[1]

    d_bb = wbb.shape[1]                            # Dv_p + Dt_p
    d_vis_p, d_txt_p, d_proj_p = dims["d_vis_p"], dims["d_txt_p"], dims["d_proj_p"]
    d_out = d_vis_p + 3 * d_proj_p

    # Adaptive batch tile: pad tiny batches only to 16 rows, cap at 512.
    tile_b = min(max_tile_b, _round_up(B, 16))
    b_pad = _round_up(B, tile_b)
    n_b = b_pad // tile_b

    # K-tiling over the flattened features (128-aligned, capped at 2048).
    tile_k = min(max_tile_k, _round_up(f_in, 128))
    f_pad = _round_up(f_in, tile_k)
    n_k = f_pad // tile_k

    if b_pad != B or f_pad != f_in:
        x_flat = jnp.pad(x_flat, ((0, b_pad - B), (0, f_pad - f_in)))
    if f_pad != wbb.shape[0]:
        wbb = jnp.pad(wbb, ((0, f_pad - wbb.shape[0]), (0, 0)))

    # VMEM budget: double-buffered x/wbb/output tiles + resident proj params
    # + f32 accumulator.  Floor 32 MiB, ceiling 64 MiB (v7x per-TC VMEM).
    vmem_est = (2 * tile_b * tile_k * 4          # x f32 tile, 2 buffers
                + 2 * tile_k * d_bb * 2          # wbb bf16 tile, 2 buffers
                + 2 * d_txt_p * 3 * d_proj_p * 2  # wp bf16 (resident)
                + 2 * (d_bb + 3 * d_proj_p) * 4  # biases
                + 2 * tile_b * d_out * 4         # fused output, 2 buffers
                + tile_b * d_bb * 4)             # accumulator scratch
    vmem_limit = int(min(max(32 * 1024 * 1024, 2 * vmem_est),
                         64 * 1024 * 1024))

    flops = 2 * b_pad * f_pad * d_bb + 2 * b_pad * d_txt_p * 3 * d_proj_p
    bytes_accessed = (b_pad * f_pad * 4 + wbb.size * 2 + wp.size * 2
                      + bbb.size * 4 + bp.size * 4 + b_pad * d_out * 4)
    cost = pl.CostEstimate(flops=int(flops),
                           transcendentals=int(4 * b_pad),
                           bytes_accessed=int(bytes_accessed))

    kernel = functools.partial(hlss_kernel, d_vis=d_vis_p, d_proj=d_proj_p)

    out = pl.pallas_call(
        kernel,
        out_shape=jax.ShapeDtypeStruct((b_pad, d_out), jnp.float32),
        grid=(n_b, n_k),
        in_specs=[
            pl.BlockSpec((tile_b, tile_k), lambda b, k: (b, k)),   # x tile
            pl.BlockSpec((tile_k, d_bb), lambda b, k: (k, 0)),     # fused bb W
            pl.BlockSpec((1, d_bb), lambda b, k: (0, 0)),          # fused bb b
            pl.BlockSpec((d_txt_p, 3 * d_proj_p), lambda b, k: (0, 0)),  # proj W
            pl.BlockSpec((1, 3 * d_proj_p), lambda b, k: (0, 0)),        # proj b
        ],
        out_specs=pl.BlockSpec((tile_b, d_out), lambda b, k: (b, 0)),
        scratch_shapes=[pltpu.VMEM((tile_b, d_bb), jnp.float32)],
        compiler_params=pltpu.CompilerParams(
            dimension_semantics=("parallel", "arbitrary"),
            vmem_limit_bytes=vmem_limit),
        cost_estimate=cost,
    )(x_flat, wbb, bbb, wp, bp)

    # Drop batch/feature padding, split the fused slab, then torch's
    # .unsqueeze(1).
    d_vis, d_proj = dims["d_vis"], dims["d_proj"]
    o1 = d_vis_p
    o2 = d_vis_p + d_proj_p
    o3 = d_vis_p + 2 * d_proj_p
    vis = out[:B, :d_vis]
    p1 = out[:B, o1:o1 + d_proj]
    p2 = out[:B, o2:o2 + d_proj]
    p3 = out[:B, o3:o3 + d_proj]
    return (vis[:, None, :], p1[:, None, :], p2[:, None, :], p3[:, None, :])


def _reference_forward(x_nchw, params):
    """Pure-JAX reference with the same bf16-matmul / f32-accum semantics."""
    B = x_nchw.shape[0]
    bf = jnp.bfloat16
    x = x_nchw.reshape(B, -1).astype(bf)
    wv, bv, wt, bt, w1, b1, w2, b2, w3, b3 = params
    vis = jnp.maximum(
        jnp.dot(x, wv.astype(bf), preferred_element_type=jnp.float32) + bv, 0.0)
    txt = jnp.maximum(
        jnp.dot(x, wt.astype(bf), preferred_element_type=jnp.float32) + bt, 0.0)
    txt_b = txt.astype(bf)
    p1 = jnp.dot(txt_b, w1.astype(bf), preferred_element_type=jnp.float32) + b1
    p2 = jnp.dot(txt_b, w2.astype(bf), preferred_element_type=jnp.float32) + b2
    p3 = jnp.dot(txt_b, w3.astype(bf), preferred_element_type=jnp.float32) + b3
    n = _l2_normalize_rows
    return (n(vis)[:, None, :], n(p1)[:, None, :],
            n(p2)[:, None, :], n(p3)[:, None, :])


def init_params(key, in_features, d_vis, d_txt, d_proj):
    ks = jax.random.split(key, 10)
    scale = 0.02
    wv = scale * jax.random.normal(ks[0], (in_features, d_vis), jnp.float32)
    bv = scale * jax.random.normal(ks[1], (1, d_vis), jnp.float32)
    wt = scale * jax.random.normal(ks[2], (in_features, d_txt), jnp.float32)
    bt = scale * jax.random.normal(ks[3], (1, d_txt), jnp.float32)
    w1 = scale * jax.random.normal(ks[4], (d_txt, d_proj), jnp.float32)
    b1 = scale * jax.random.normal(ks[5], (1, d_proj), jnp.float32)
    w2 = scale * jax.random.normal(ks[6], (d_txt, d_proj), jnp.float32)
    b2 = scale * jax.random.normal(ks[7], (1, d_proj), jnp.float32)
    w3 = scale * jax.random.normal(ks[8], (d_txt, d_proj), jnp.float32)
    b3 = scale * jax.random.normal(ks[9], (1, d_proj), jnp.float32)
    return (wv, bv, wt, bt, w1, b1, w2, b2, w3, b3)


if __name__ == "__main__":
    key = jax.random.PRNGKey(0)
    k_x, k_p = jax.random.split(key)

    # Small shapes consistent with the module's forward: NCHW image input.
    B, C, H, W = 2, 4, 16, 16
    F_in = C * H * W          # 1024 (lane friendly)
    D_vis, D_txt, D_proj = 128, 128, 128

    x = jax.random.normal(k_x, (B, C, H, W), jnp.float32)
    params = init_params(k_p, F_in, D_vis, D_txt, D_proj)
    packed, dims = pack_params(params)

    outs = hlss_granular_kl_forward(x, packed, dims)
    outs = jax.block_until_ready(outs)

    refs = _reference_forward(x, params)
    for o, r in zip(outs, refs):
        assert o.shape == r.shape, f"shape mismatch {o.shape} vs {r.shape}"
        assert jnp.allclose(o, r, atol=1e-4, rtol=1e-4), "mismatch vs reference"
        # sanity: rows are unit-norm
        assert jnp.allclose(jnp.linalg.norm(o[:, 0, :], axis=-1), 1.0,
                            atol=1e-3)

    print("KERNEL_OK")
</pallas_src>

<mosaic_0001>
module attributes {stable_mosaic.version = 11 : i64} {
  func.func @hlss_kernel(%arg0: i32, %arg1: i32, %arg2: memref<16x1024xf32, #tpu.memory_space<vmem>>, %arg3: memref<1024x256xbf16, #tpu.memory_space<vmem>>, %arg4: memref<1x256xf32, #tpu.memory_space<vmem>>, %arg5: memref<128x384xbf16, #tpu.memory_space<vmem>>, %arg6: memref<1x384xf32, #tpu.memory_space<vmem>>, %arg7: memref<16x512xf32, #tpu.memory_space<vmem>>, %arg8: memref<16x256xf32, #tpu.memory_space<vmem>>) attributes {dimension_semantics = [#tpu.dimension_semantics<parallel>, #tpu.dimension_semantics<arbitrary>], iteration_bounds = array<i64: 1, 1>, scalar_prefetch = 0 : i64, scratch_operands = 1 : i64, tpu.core_type = #tpu.core_type<tc>, window_params = [{transform_indices = @transform_0, window_bounds = array<i64: 16, 1024>}, {transform_indices = @transform_1, window_bounds = array<i64: 1024, 256>}, {pipeline_mode = #tpu.pipeline_mode<synchronous>, transform_indices = @transform_2, window_bounds = array<i64: 1, 256>}, {pipeline_mode = #tpu.pipeline_mode<synchronous>, transform_indices = @transform_3, window_bounds = array<i64: 128, 384>}, {pipeline_mode = #tpu.pipeline_mode<synchronous>, transform_indices = @transform_4, window_bounds = array<i64: 1, 384>}, {transform_indices = @transform_5, window_bounds = array<i64: 16, 512>}]} {
    %c0_i32 = arith.constant 0 : i32
    %0 = arith.cmpi eq, %arg1, %c0_i32 : i32
    %1 = arith.extui %0 : i1 to i32
    %c0_i32_0 = arith.constant 0 : i32
    %2 = arith.cmpi ne, %1, %c0_i32_0 : i32
    scf.if %2 {
      %cst_10 = arith.constant 0.000000e+00 : f32
      %13 = vector.broadcast %cst_10 : f32 to vector<16x256xf32>
      %c0_11 = arith.constant 0 : index
      %c0_12 = arith.constant 0 : index
      %14 = vector.load %arg8[%c0_11, %c0_12] : memref<16x256xf32, #tpu.memory_space<vmem>>, vector<16x256xf32>
      tpu.vector_store %arg8[%c0_11, %c0_12], %13 {strides = array<i32>} : memref<16x256xf32, #tpu.memory_space<vmem>>, vector<16x256xf32>,
    } else {
    }
    %c0 = arith.constant 0 : index
    %c0_1 = arith.constant 0 : index
    %3 = vector.load %arg2[%c0, %c0_1] : memref<16x1024xf32, #tpu.memory_space<vmem>>, vector<16x1024xf32>
    %4 = arith.truncf %3 : vector<16x1024xf32> to vector<16x1024xbf16>
    %c0_2 = arith.constant 0 : index
    %c0_3 = arith.constant 0 : index
    %5 = vector.load %arg8[%c0_2, %c0_3] : memref<16x256xf32, #tpu.memory_space<vmem>>, vector<16x256xf32>
    %c0_4 = arith.constant 0 : index
    %c0_5 = arith.constant 0 : index
    %6 = vector.load %arg3[%c0_4, %c0_5] : memref<1024x256xbf16, #tpu.memory_space<vmem>>, vector<1024x256xbf16>
    %cst = arith.constant dense<0.000000e+00> : vector<16x256xf32>
    %7 = tpu.matmul %4, %6, %cst {dimension_numbers = #tpu.dot_dimension_numbers<[1], [0], [0], [1], [0, 0, 1, 1], [], []>} : vector<16x1024xbf16>, vector<1024x256xbf16>, vector<16x256xf32> -> vector<16x256xf32>
    %8 = arith.addf %5, %7 : vector<16x256xf32>
    %c0_6 = arith.constant 0 : index
    %c0_7 = arith.constant 0 : index
    %9 = vector.load %arg8[%c0_6, %c0_7] : memref<16x256xf32, #tpu.memory_space<vmem>>, vector<16x256xf32>
    tpu.vector_store %arg8[%c0_6, %c0_7], %8 {strides = array<i32>} : memref<16x256xf32, #tpu.memory_space<vmem>>, vector<16x256xf32>,
    %c0_i32_8 = arith.constant 0 : i32
    %10 = arith.cmpi eq, %arg1, %c0_i32_8 : i32
    %11 = arith.extui %10 : i1 to i32
    %c0_i32_9 = arith.constant 0 : i32
    %12 = arith.cmpi ne, %11, %c0_i32_9 : i32
    scf.if %12 {
      %c0_10 = arith.constant 0 : index
      %c0_11 = arith.constant 0 : index
      %13 = vector.load %arg8[%c0_10, %c0_11] : memref<16x256xf32, #tpu.memory_space<vmem>>, vector<16x256xf32>
      %c0_12 = arith.constant 0 : index
      %c0_13 = arith.constant 0 : index
      %14 = vector.load %arg4[%c0_12, %c0_13] : memref<1x256xf32, #tpu.memory_space<vmem>>, vector<1x256xf32>
      %15 = vector.broadcast %14 : vector<1x256xf32> to vector<16x256xf32>
      %16 = arith.addf %13, %15 : vector<16x256xf32>
      %cst_14 = arith.constant 0.000000e+00 : f32
      %17 = vector.broadcast %cst_14 : f32 to vector<16x256xf32>
      %18 = arith.maximumf %16, %17 : vector<16x256xf32>
      %19 = vector.extract_strided_slice %18 {offsets = [0, 0], sizes = [16, 128], strides = [1, 1]} : vector<16x256xf32> to vector<16x128xf32>
      %20 = vector.extract_strided_slice %18 {offsets = [0, 128], sizes = [16, 128], strides = [1, 1]} : vector<16x256xf32> to vector<16x128xf32>
      %21 = arith.truncf %20 : vector<16x128xf32> to vector<16x128xbf16>
      %c0_15 = arith.constant 0 : index
      %c0_16 = arith.constant 0 : index
      %22 = vector.load %arg5[%c0_15, %c0_16] : memref<128x384xbf16, #tpu.memory_space<vmem>>, vector<128x384xbf16>
      %cst_17 = arith.constant dense<0.000000e+00> : vector<16x384xf32>
      %23 = tpu.matmul %21, %22, %cst_17 {dimension_numbers = #tpu.dot_dimension_numbers<[1], [0], [0], [1], [0, 0, 1, 1], [], []>} : vector<16x128xbf16>, vector<128x384xbf16>, vector<16x384xf32> -> vector<16x384xf32>
      %c0_18 = arith.constant 0 : index
      %c0_19 = arith.constant 0 : index
      %24 = vector.load %arg6[%c0_18, %c0_19] : memref<1x384xf32, #tpu.memory_space<vmem>>, vector<1x384xf32>
      %25 = vector.broadcast %24 : vector<1x384xf32> to vector<16x384xf32>
      %26 = arith.addf %23, %25 : vector<16x384xf32>
      %27 = arith.mulf %19, %19 : vector<16x128xf32>
      %cst_20 = arith.constant dense<0.000000e+00> : vector<16xf32>
      %28 = vector.multi_reduction <add>, %27, %cst_20 [1] : vector<16x128xf32> to vector<16xf32>
      %29 = vector.shape_cast %28 : vector<16xf32> to vector<16x1xf32>
      %cst_21 = arith.constant 1.000000e-24 : f32
      %30 = vector.broadcast %cst_21 : f32 to vector<16x1xf32>
      %31 = arith.maximumf %29, %30 : vector<16x1xf32>
      %32 = math.rsqrt %31 : vector<16x1xf32>
      %33 = vector.broadcast %32 : vector<16x1xf32> to vector<16x128xf32>
      %34 = arith.mulf %19, %33 : vector<16x128xf32>
      %c0_22 = arith.constant 0 : index
      %c0_23 = arith.constant 0 : index
      %35 = vector.load %arg7[%c0_22, %c0_23] : memref<16x512xf32, #tpu.memory_space<vmem>>, vector<16x128xf32>
      tpu.vector_store %arg7[%c0_22, %c0_23], %34 {strides = array<i32>} : memref<16x512xf32, #tpu.memory_space<vmem>>, vector<16x128xf32>,
      %36 = vector.extract_strided_slice %26 {offsets = [0, 0], sizes = [16, 128], strides = [1, 1]} : vector<16x384xf32> to vector<16x128xf32>
      %37 = arith.mulf %36, %36 : vector<16x128xf32>
      %cst_24 = arith.constant dense<0.000000e+00> : vector<16xf32>
      %38 = vector.multi_reduction <add>, %37, %cst_24 [1] : vector<16x128xf32> to vector<16xf32>
      %39 = vector.shape_cast %38 : vector<16xf32> to vector<16x1xf32>
      %cst_25 = arith.constant 1.000000e-24 : f32
      %40 = vector.broadcast %cst_25 : f32 to vector<16x1xf32>
      %41 = arith.maximumf %39, %40 : vector<16x1xf32>
      %42 = math.rsqrt %41 : vector<16x1xf32>
      %43 = vector.broadcast %42 : vector<16x1xf32> to vector<16x128xf32>
      %44 = arith.mulf %36, %43 : vector<16x128xf32>
      %c0_26 = arith.constant 0 : index
      %c128 = arith.constant 128 : index
      %45 = vector.load %arg7[%c0_26, %c128] : memref<16x512xf32, #tpu.memory_space<vmem>>, vector<16x128xf32>
      tpu.vector_store %arg7[%c0_26, %c128], %44 {strides = array<i32>} : memref<16x512xf32, #tpu.memory_space<vmem>>, vector<16x128xf32>,
      %46 = vector.extract_strided_slice %26 {offsets = [0, 128], sizes = [16, 128], strides = [1, 1]} : vector<16x384xf32> to vector<16x128xf32>
      %47 = arith.mulf %46, %46 : vector<16x128xf32>
      %cst_27 = arith.constant dense<0.000000e+00> : vector<16xf32>
      %48 = vector.multi_reduction <add>, %47, %cst_27 [1] : vector<16x128xf32> to vector<16xf32>
      %49 = vector.shape_cast %48 : vector<16xf32> to vector<16x1xf32>
      %cst_28 = arith.constant 1.000000e-24 : f32
      %50 = vector.broadcast %cst_28 : f32 to vector<16x1xf32>
      %51 = arith.maximumf %49, %50 : vector<16x1xf32>
      %52 = math.rsqrt %51 : vector<16x1xf32>
      %53 = vector.broadcast %52 : vector<16x1xf32> to vector<16x128xf32>
      %54 = arith.mulf %46, %53 : vector<16x128xf32>
      %c0_29 = arith.constant 0 : index
      %c256 = arith.constant 256 : index
      %55 = vector.load %arg7[%c0_29, %c256] : memref<16x512xf32, #tpu.memory_space<vmem>>, vector<16x128xf32>
      tpu.vector_store %arg7[%c0_29, %c256], %54 {strides = array<i32>} : memref<16x512xf32, #tpu.memory_space<vmem>>, vector<16x128xf32>,
      %56 = vector.extract_strided_slice %26 {offsets = [0, 256], sizes = [16, 128], strides = [1, 1]} : vector<16x384xf32> to vector<16x128xf32>
      %57 = arith.mulf %56, %56 : vector<16x128xf32>
      %cst_30 = arith.constant dense<0.000000e+00> : vector<16xf32>
      %58 = vector.multi_reduction <add>, %57, %cst_30 [1] : vector<16x128xf32> to vector<16xf32>
      %59 = vector.shape_cast %58 : vector<16xf32> to vector<16x1xf32>
      %cst_31 = arith.constant 1.000000e-24 : f32
      %60 = vector.broadcast %cst_31 : f32 to vector<16x1xf32>
      %61 = arith.maximumf %59, %60 : vector<16x1xf32>
      %62 = math.rsqrt %61 : vector<16x1xf32>
      %63 = vector.broadcast %62 : vector<16x1xf32> to vector<16x128xf32>
      %64 = arith.mulf %56, %63 : vector<16x128xf32>
      %c0_32 = arith.constant 0 : index
      %c384 = arith.constant 384 : index
      %65 = vector.load %arg7[%c0_32, %c384] : memref<16x512xf32, #tpu.memory_space<vmem>>, vector<16x128xf32>
      tpu.vector_store %arg7[%c0_32, %c384], %64 {strides = array<i32>} : memref<16x512xf32, #tpu.memory_space<vmem>>, vector<16x128xf32>,
    } else {
    }
    return
  }
  func.func @transform_0(%arg0: i32, %arg1: i32) -> (i32, i32) {
    %c0_i32 = arith.constant 0 : i32
    return %arg0, %arg1 : i32, i32
  }
  func.func @transform_1(%arg0: i32, %arg1: i32) -> (i32, i32) {
    %c0_i32 = arith.constant 0 : i32
    %c0_i32_0 = arith.constant 0 : i32
    return %arg1, %c0_i32 : i32, i32
  }
  func.func @transform_2(%arg0: i32, %arg1: i32) -> (i32, i32) {
    %c0_i32 = arith.constant 0 : i32
    %c0_i32_0 = arith.constant 0 : i32
    %c0_i32_1 = arith.constant 0 : i32
    return %c0_i32, %c0_i32_0 : i32, i32
  }
  func.func @transform_3(%arg0: i32, %arg1: i32) -> (i32, i32) {
    %c0_i32 = arith.constant 0 : i32
    %c0_i32_0 = arith.constant 0 : i32
    %c0_i32_1 = arith.constant 0 : i32
    return %c0_i32, %c0_i32_0 : i32, i32
  }
  func.func @transform_4(%arg0: i32, %arg1: i32) -> (i32, i32) {
    %c0_i32 = arith.constant 0 : i32
    %c0_i32_0 = arith.constant 0 : i32
    %c0_i32_1 = arith.constant 0 : i32
    return %c0_i32, %c0_i32_0 : i32, i32
  }
  func.func @transform_5(%arg0: i32, %arg1: i32) -> (i32, i32) {
    %c0_i32 = arith.constant 0 : i32
    %c0_i32_0 = arith.constant 0 : i32
    return %arg0, %c0_i32 : i32, i32
  }
}

</mosaic_0001>

<llo_original>
// kernel: tpu_custom_call.1
$region0: #{tpu_custom_call.1}
  #allocation0 [shape = 'u32[]', space=smem, size = 0x4, offset = 0x4, fixed_abs, tag = 'smem constant byte address 0x4 - core index']
  #allocation1 [shape = 'u32[144,128]{1,0:T(1,128)}', space=vmem, size = 0x12000, scoped, tag = 'internal scratch']
  #allocation2 [shape = 'f32[16,256]{1,0:T(8,128)}', space=vmem, size = 0x4000, scoped, tag = 'scratch operand']
  %s0 = inlined_call_operand.hbm [shape: f32[16,1024], index: 0, kind: input, shape index: {}]
  %s1 = inlined_call_operand.hbm [shape: bf16[1024,256], index: 1, kind: input, shape index: {}]
  %s2 = inlined_call_operand.vmem [shape: f32[1,256], index: 2, kind: input, shape index: {}]
  %s3 = inlined_call_operand.hbm [shape: bf16[128,384], index: 3, kind: input, shape index: {}]
  %s4 = inlined_call_operand.vmem [shape: f32[1,384], index: 4, kind: input, shape index: {}]
  %s5 = inlined_call_operand.hbm [shape: f32[16,512], index: 5, kind: output, shape index: {}]
  %s6 = sld [smem:[#allocation0]]
  $region50: #{tpu_custom_call.1} parent=0
    _
  %s8 = ssub.s32 1, %s6
  %s9 = scalar_select 0, %s8, %s6
  $region1: #{tpu_custom_call.1} parent=0
    #allocation3 [shape = 'u8[65536]{0}', space=vmem, size = 0x10000, scoped, tag = 'input window, operand 0, single buffered']
    #allocation4 [shape = 's32[1]{0}', space=sflag, size = 0x4, scoped, tag = 'scoped memory for tpu_custom_call.1']
    #allocation5 [shape = 's32[1]{0}', space=sflag, size = 0x4, scoped, tag = 'scoped memory for tpu_custom_call.1']
    #allocation6 [shape = 'u8[524288]{0}', space=vmem, size = 0x80000, scoped, tag = 'input window, operand 1, single buffered']
    #allocation7 [shape = 's32[1]{0}', space=sflag, size = 0x4, scoped, tag = 'scoped memory for tpu_custom_call.1']
    #allocation8 [shape = 'u8[98304]{0}', space=vmem, size = 0x18000, scoped, tag = 'input window, operand 3, single buffered']
    #allocation9 [shape = 'u8[32768]{0}', space=vmem, size = 0x8000, scoped, tag = 'output window, operand 0, single buffered']
    %10 = vsyncpa [#allocation4], 0
    %11 = vsyncpa [#allocation7], 0
    %12 = vsyncpa [#allocation5], 0
    // Predicated region
    $region2: #{tpu_custom_call.1} parent=1 // pred_check
      _
    $region3: #{tpu_custom_call.1} parent=1 // pred_check_branch
      %14 = sbr.rel (0) target = $region5
    $region4: #{tpu_custom_call.1} parent=1 // pred_region
      %s16 = ssub.s32 2048, 2048
      %17 = vsyncadd [#allocation4], %s16
      %s18 = sshll.u32 [#allocation3], 4
      %s19 = int_to_ptr.vmem [resolvable:$true] %s18
      %24 = dma.hbm_to_vmem [thread:$0]  %s0, 2048, %s19, [#allocation4], 1024, 1024, 64
    $region5: #{tpu_custom_call.1} parent=1 // pred_fallthru
      _
    // Predicated region
    $region6: #{tpu_custom_call.1} parent=1 // pred_check
      _
    $region7: #{tpu_custom_call.1} parent=1 // pred_check_branch
      %26 = sbr.rel (0) target = $region9
    $region8: #{tpu_custom_call.1} parent=1 // pred_region
      %s28 = ssub.s32 16384, 16384
      %29 = vsyncadd [#allocation7], %s28
      %s30 = sshll.u32 [#allocation6], 4
      %s31 = int_to_ptr.vmem [resolvable:$true] %s30
      %36 = dma.hbm_to_vmem [thread:$0]  %s1, 16384, %s31, [#allocation7], 128, 128, 8
    $region9: #{tpu_custom_call.1} parent=1 // pred_fallthru
      _
    // Predicated region
    $region10: #{tpu_custom_call.1} parent=1 // pred_check
      _
    $region11: #{tpu_custom_call.1} parent=1 // pred_check_branch
      %38 = sbr.rel (0) target = $region13
    $region12: #{tpu_custom_call.1} parent=1 // pred_region
      _
    $region13: #{tpu_custom_call.1} parent=1 // pred_fallthru
      _
    // Predicated region
    $region14: #{tpu_custom_call.1} parent=1 // pred_check
      _
    $region15: #{tpu_custom_call.1} parent=1 // pred_check_branch
      %40 = sbr.rel (0) target = $region17
    $region16: #{tpu_custom_call.1} parent=1 // pred_region
      %s42 = ssub.s32 3072, 3072
      %43 = vsyncadd [#allocation7], %s42
      %s44 = sshll.u32 [#allocation8], 4
      %s45 = int_to_ptr.vmem [resolvable:$true] %s44
      %50 = dma.hbm_to_vmem [thread:$0]  %s3, 3072, %s45, [#allocation7], 192, 192, 12
    $region17: #{tpu_custom_call.1} parent=1 // pred_fallthru
      _
    // Predicated region
    $region18: #{tpu_custom_call.1} parent=1 // pred_check
      _
    $region19: #{tpu_custom_call.1} parent=1 // pred_check_branch
      %52 = sbr.rel (0) target = $region21
    $region20: #{tpu_custom_call.1} parent=1 // pred_region
      _
    $region21: #{tpu_custom_call.1} parent=1 // pred_fallthru
      _
    // Predicated region
    $region22: #{tpu_custom_call.1} parent=1 // pred_check
      _
    $region23: #{tpu_custom_call.1} parent=1 // pred_check_branch
      %54 = sbr.rel (0) target = $region25
    $region24: #{tpu_custom_call.1} parent=1 // pred_region
      %55 = dma.done [#allocation4], 2048
    $region25: #{tpu_custom_call.1} parent=1 // pred_fallthru
      _
    // Predicated region
    $region26: #{tpu_custom_call.1} parent=1 // pred_check
      _
    $region27: #{tpu_custom_call.1} parent=1 // pred_check_branch
      %57 = sbr.rel (0) target = $region29
    $region28: #{tpu_custom_call.1} parent=1 // pred_region
      %58 = dma.done [#allocation7], 16384
    $region29: #{tpu_custom_call.1} parent=1 // pred_fallthru
      _
    // Predicated region
    $region30: #{tpu_custom_call.1} parent=1 // pred_check
      _
    $region31: #{tpu_custom_call.1} parent=1 // pred_check_branch
      %60 = sbr.rel (0) target = $region33
    $region32: #{tpu_custom_call.1} parent=1 // pred_region
      %61 = dma.done [#allocation7], 3072
    $region33: #{tpu_custom_call.1} parent=1 // pred_fallthru
      _
    %p63 = scmp.eq.s32.totalorder 0, 0
    // Predicated region
    $region34: #{tpu_custom_call.1} parent=1 // pred_check
      %p64 = pneg %p63
    $region35: #{tpu_custom_call.1} parent=1 // pred_check_branch
      %66 = sbr.rel (%p64) target = $region37
    $region36: #{tpu_custom_call.1} parent=1 // pred_region
      %67 = vst [vmem:[#allocation2] sm:$0xff] 0.0
      %68 = vst [vmem:[#allocation2 + $0x8] sm:$0xff] 0.0
      %69 = vst [vmem:[#allocation2 + $0x10] sm:$0xff] 0.0
      %70 = vst [vmem:[#allocation2 + $0x18] sm:$0xff] 0.0
    $region37: #{tpu_custom_call.1} parent=1 // pred_fallthru
      _
    %v71 = vld [vmem:[#allocation3] sm:$0xff]
    %v72 = vld [vmem:[#allocation3 + $0x8] sm:$0xff]
    %v73 = vld [vmem:[#allocation3 + $0x10] sm:$0xff]
    %v74 = vld [vmem:[#allocation3 + $0x18] sm:$0xff]
    %v75 = vld [vmem:[#allocation3 + $0x20] sm:$0xff]
    %v76 = vld [vmem:[#allocation3 + $0x28] sm:$0xff]
    %v77 = vld [vmem:[#allocation3 + $0x30] sm:$0xff]
    %v78 = vld [vmem:[#allocation3 + $0x38] sm:$0xff]
    %v79 = vld [vmem:[#allocation3 + $0x40] sm:$0xff]
    %v80 = vld [vmem:[#allocation3 + $0x48] sm:$0xff]
    %v81 = vld [vmem:[#allocation3 + $0x50] sm:$0xff]
    %v82 = vld [vmem:[#allocation3 + $0x58] sm:$0xff]
    %v83 = vld [vmem:[#allocation3 + $0x60] sm:$0xff]
    %v84 = vld [vmem:[#allocation3 + $0x68] sm:$0xff]
    %v85 = vld [vmem:[#allocation3 + $0x70] sm:$0xff]
    %v86 = vld [vmem:[#allocation3 + $0x78] sm:$0xff]
    %v87 = vpack.c.bf16 %v79, %v71
    %v88 = vpack.c.bf16 %v80, %v72
    %v89 = vpack.c.bf16 %v81, %v73
    %v90 = vpack.c.bf16 %v82, %v74
    %v91 = vpack.c.bf16 %v83, %v75
    %v92 = vpack.c.bf16 %v84, %v76
    %v93 = vpack.c.bf16 %v85, %v77
    %v94 = vpack.c.bf16 %v86, %v78
    %v95 = vld [vmem:[#allocation2] sm:$0xff]
    %v96 = vld [vmem:[#allocation2 + $0x8] sm:$0xff]
    %v97 = vld [vmem:[#allocation2 + $0x10] sm:$0xff]
    %v98 = vld [vmem:[#allocation2 + $0x18] sm:$0xff]
    %v99 = vld [vmem:[#allocation6] sm:$0xff]
    %v100 = vld [vmem:[#allocation6 + $0x8] sm:$0xff]
    %v101 = vld [vmem:[#allocation6 + $0x10] sm:$0xff]
    %v102 = vld [vmem:[#allocation6 + $0x18] sm:$0xff]
    %v103 = vld [vmem:[#allocation6 + $0x20] sm:$0xff]
    %v104 = vld [vmem:[#allocation6 + $0x28] sm:$0xff]
    %v105 = vld [vmem:[#allocation6 + $0x30] sm:$0xff]
    %v106 = vld [vmem:[#allocation6 + $0x38] sm:$0xff]
    %v107 = vld [vmem:[#allocation6 + $0x40] sm:$0xff]
    %v108 = vld [vmem:[#allocation6 + $0x48] sm:$0xff]
    %v109 = vld [vmem:[#allocation6 + $0x50] sm:$0xff]
    %v110 = vld [vmem:[#allocation6 + $0x58] sm:$0xff]
    %v111 = vld [vmem:[#allocation6 + $0x60] sm:$0xff]
    %v112 = vld [vmem:[#allocation6 + $0x68] sm:$0xff]
    %v113 = vld [vmem:[#allocation6 + $0x70] sm:$0xff]
    %v114 = vld [vmem:[#allocation6 + $0x78] sm:$0xff]
    %v115 = vld [vmem:[#allocation6 + $0x80] sm:$0xff]
    %v116 = vld [vmem:[#allocation6 + $0x88] sm:$0xff]
    %v117 = vld [vmem:[#allocation6 + $0x90] sm:$0xff]
    %v118 = vld [vmem:[#allocation6 + $0x98] sm:$0xff]
    %v119 = vld [vmem:[#allocation6 + $0xa0] sm:$0xff]
    %v120 = vld [vmem:[#allocation6 + $0xa8] sm:$0xff]
    %v121 = vld [vmem:[#allocation6 + $0xb0] sm:$0xff]
    %v122 = vld [vmem:[#allocation6 + $0xb8] sm:$0xff]
    %v123 = vld [vmem:[#allocation6 + $0xc0] sm:$0xff]
    %v124 = vld [vmem:[#allocation6 + $0xc8] sm:$0xff]
    %v125 = vld [vmem:[#allocation6 + $0xd0] sm:$0xff]
    %v126 = vld [vmem:[#allocation6 + $0xd8] sm:$0xff]
    %v127 = vld [vmem:[#allocation6 + $0xe0] sm:$0xff]
    %v128 = vld [vmem:[#allocation6 + $0xe8] sm:$0xff]
    %v129 = vld [vmem:[#allocation6 + $0xf0] sm:$0xff]
    %v130 = vld [vmem:[#allocation6 + $0xf8] sm:$0xff]
    %v131 = vld [vmem:[#allocation6 + $0x100] sm:$0xff]
    %v132 = vld [vmem:[#allocation6 + $0x108] sm:$0xff]
    %v133 = vld [vmem:[#allocation6 + $0x110] sm:$0xff]
    %v134 = vld [vmem:[#allocation6 + $0x118] sm:$0xff]
    %v135 = vld [vmem:[#allocation6 + $0x120] sm:$0xff]
    %v136 = vld [vmem:[#allocation6 + $0x128] sm:$0xff]
    %v137 = vld [vmem:[#allocation6 + $0x130] sm:$0xff]
    %v138 = vld [vmem:[#allocation6 + $0x138] sm:$0xff]
    %v139 = vld [vmem:[#allocation6 + $0x140] sm:$0xff]
    %v140 = vld [vmem:[#allocation6 + $0x148] sm:$0xff]
    %v141 = vld [vmem:[#allocation6 + $0x150] sm:$0xff]
    %v142 = vld [vmem:[#allocation6 + $0x158] sm:$0xff]
    %v143 = vld [vmem:[#allocation6 + $0x160] sm:$0xff]
    %v144 = vld [vmem:[#allocation6 + $0x168] sm:$0xff]
    %v145 = vld [vmem:[#allocation6 + $0x170] sm:$0xff]
    %v146 = vld [vmem:[#allocation6 + $0x178] sm:$0xff]
    %v147 = vld [vmem:[#allocation6 + $0x180] sm:$0xff]
    %v148 = vld [vmem:[#allocation6 + $0x188] sm:$0xff]
    %v149 = vld [vmem:[#allocation6 + $0x190] sm:$0xff]
    %v150 = vld [vmem:[#allocation6 + $0x198] sm:$0xff]
    %v151 = vld [vmem:[#allocation6 + $0x1a0] sm:$0xff]
    %v152 = vld [vmem:[#allocation6 + $0x1a8] sm:$0xff]
    %v153 = vld [vmem:[#allocation6 + $0x1b0] sm:$0xff]
    %v154 = vld [vmem:[#allocation6 + $0x1b8] sm:$0xff]
    %v155 = vld [vmem:[#allocation6 + $0x1c0] sm:$0xff]
    %v156 = vld [vmem:[#allocation6 + $0x1c8] sm:$0xff]
    %v157 = vld [vmem:[#allocation6 + $0x1d0] sm:$0xff]
    %v158 = vld [vmem:[#allocation6 + $0x1d8] sm:$0xff]
    %v159 = vld [vmem:[#allocation6 + $0x1e0] sm:$0xff]
    %v160 = vld [vmem:[#allocation6 + $0x1e8] sm:$0xff]
    %v161 = vld [vmem:[#allocation6 + $0x1f0] sm:$0xff]
    %v162 = vld [vmem:[#allocation6 + $0x1f8] sm:$0xff]
    %v163 = vld [vmem:[#allocation6 + $0x200] sm:$0xff]
    %v164 = vld [vmem:[#allocation6 + $0x208] sm:$0xff]
    %v165 = vld [vmem:[#allocation6 + $0x210] sm:$0xff]
    %v166 = vld [vmem:[#allocation6 + $0x218] sm:$0xff]
    %v167 = vld [vmem:[#allocation6 + $0x220] sm:$0xff]
    %v168 = vld [vmem:[#allocation6 + $0x228] sm:$0xff]
    %v169 = vld [vmem:[#allocation6 + $0x230] sm:$0xff]
    %v170 = vld [vmem:[#allocation6 + $0x238] sm:$0xff]
    %v171 = vld [vmem:[#allocation6 + $0x240] sm:$0xff]
    %v172 = vld [vmem:[#allocation6 + $0x248] sm:$0xff]
    %v173 = vld [vmem:[#allocation6 + $0x250] sm:$0xff]
    %v174 = vld [vmem:[#allocation6 + $0x258] sm:$0xff]
    %v175 = vld [vmem:[#allocation6 + $0x260] sm:$0xff]
    %v176 = vld [vmem:[#allocation6 + $0x268] sm:$0xff]
    %v177 = vld [vmem:[#allocation6 + $0x270] sm:$0xff]
    %v178 = vld [vmem:[#allocation6 + $0x278] sm:$0xff]
    %v179 = vld [vmem:[#allocation6 + $0x280] sm:$0xff]
    %v180 = vld [vmem:[#allocation6 + $0x288] sm:$0xff]
    %v181 = vld [vmem:[#allocation6 + $0x290] sm:$0xff]
    %v182 = vld [vmem:[#allocation6 + $0x298] sm:$0xff]
    %v183 = vld [vmem:[#allocation6 + $0x2a0] sm:$0xff]
    %v184 = vld [vmem:[#allocation6 + $0x2a8] sm:$0xff]
    %v185 = vld [vmem:[#allocation6 + $0x2b0] sm:$0xff]
    %v186 = vld [vmem:[#allocation6 + $0x2b8] sm:$0xff]
    %v187 = vld [vmem:[#allocation6 + $0x2c0] sm:$0xff]
    %v188 = vld [vmem:[#allocation6 + $0x2c8] sm:$0xff]
    %v189 = vld [vmem:[#allocation6 + $0x2d0] sm:$0xff]
    %v190 = vld [vmem:[#allocation6 + $0x2d8] sm:$0xff]
    %v191 = vld [vmem:[#allocation6 + $0x2e0] sm:$0xff]
    %v192 = vld [vmem:[#allocation6 + $0x2e8] sm:$0xff]
    %v193 = vld [vmem:[#allocation6 + $0x2f0] sm:$0xff]
    %v194 = vld [vmem:[#allocation6 + $0x2f8] sm:$0xff]
    %v195 = vld [vmem:[#allocation6 + $0x300] sm:$0xff]
    %v196 = vld [vmem:[#allocation6 + $0x308] sm:$0xff]
    %v197 = vld [vmem:[#allocation6 + $0x310] sm:$0xff]
    %v198 = vld [vmem:[#allocation6 + $0x318] sm:$0xff]
    %v199 = vld [vmem:[#allocation6 + $0x320] sm:$0xff]
    %v200 = vld [vmem:[#allocation6 + $0x328] sm:$0xff]
    %v201 = vld [vmem:[#allocation6 + $0x330] sm:$0xff]
    %v202 = vld [vmem:[#allocation6 + $0x338] sm:$0xff]
    %v203 = vld [vmem:[#allocation6 + $0x340] sm:$0xff]
    %v204 = vld [vmem:[#allocation6 + $0x348] sm:$0xff]
    %v205 = vld [vmem:[#allocation6 + $0x350] sm:$0xff]
    %v206 = vld [vmem:[#allocation6 + $0x358] sm:$0xff]
    %v207 = vld [vmem:[#allocation6 + $0x360] sm:$0xff]
    %v208 = vld [vmem:[#allocation6 + $0x368] sm:$0xff]
    %v209 = vld [vmem:[#allocation6 + $0x370] sm:$0xff]
    %v210 = vld [vmem:[#allocation6 + $0x378] sm:$0xff]
    %v211 = vld [vmem:[#allocation6 + $0x380] sm:$0xff]
    %v212 = vld [vmem:[#allocation6 + $0x388] sm:$0xff]
    %v213 = vld [vmem:[#allocation6 + $0x390] sm:$0xff]
    %v214 = vld [vmem:[#allocation6 + $0x398] sm:$0xff]
    %v215 = vld [vmem:[#allocation6 + $0x3a0] sm:$0xff]
    %v216 = vld [vmem:[#allocation6 + $0x3a8] sm:$0xff]
    %v217 = vld [vmem:[#allocation6 + $0x3b0] sm:$0xff]
    %v218 = vld [vmem:[#allocation6 + $0x3b8] sm:$0xff]
    %v219 = vld [vmem:[#allocation6 + $0x3c0] sm:$0xff]
    %v220 = vld [vmem:[#allocation6 + $0x3c8] sm:$0xff]
    %v221 = vld [vmem:[#allocation6 + $0x3d0] sm:$0xff]
    %v222 = vld [vmem:[#allocation6 + $0x3d8] sm:$0xff]
    %v223 = vld [vmem:[#allocation6 + $0x3e0] sm:$0xff]
    %v224 = vld [vmem:[#allocation6 + $0x3e8] sm:$0xff]
    %v225 = vld [vmem:[#allocation6 + $0x3f0] sm:$0xff]
    %v226 = vld [vmem:[#allocation6 + $0x3f8] sm:$0xff]
    %v355 = vunpack.c.l.b16 %v99
    %v356 = vunpack.c.h.b16 %v99
    %v357 = vunpack.c.l.b16 %v100
    %v358 = vunpack.c.h.b16 %v100
    %v359 = vunpack.c.l.b16 %v101
    %v360 = vunpack.c.h.b16 %v101
    %v361 = vunpack.c.l.b16 %v102
    %v362 = vunpack.c.h.b16 %v102
    %v363 = vunpack.c.l.b16 %v103
    %v364 = vunpack.c.h.b16 %v103
    %v365 = vunpack.c.l.b16 %v104
    %v366 = vunpack.c.h.b16 %v104
    %v367 = vunpack.c.l.b16 %v105
    %v368 = vunpack.c.h.b16 %v105
    %v369 = vunpack.c.l.b16 %v106
    %v370 = vunpack.c.h.b16 %v106
    %v371 = vunpack.c.l.b16 %v107
    %v372 = vunpack.c.h.b16 %v107
    %v373 = vunpack.c.l.b16 %v108
    %v374 = vunpack.c.h.b16 %v108
    %v375 = vunpack.c.l.b16 %v109
    %v376 = vunpack.c.h.b16 %v109
    %v377 = vunpack.c.l.b16 %v110
    %v378 = vunpack.c.h.b16 %v110
    %v379 = vunpack.c.l.b16 %v111
    %v380 = vunpack.c.h.b16 %v111
    %v381 = vunpack.c.l.b16 %v112
    %v382 = vunpack.c.h.b16 %v112
    %v383 = vunpack.c.l.b16 %v113
    %v384 = vunpack.c.h.b16 %v113
    %v385 = vunpack.c.l.b16 %v114
    %v386 = vunpack.c.h.b16 %v114
    %v387 = vunpack.c.l.b16 %v115
    %v388 = vunpack.c.h.b16 %v115
    %v389 = vunpack.c.l.b16 %v116
    %v390 = vunpack.c.h.b16 %v116
    %v391 = vunpack.c.l.b16 %v117
    %v392 = vunpack.c.h.b16 %v117
    %v393 = vunpack.c.l.b16 %v118
    %v394 = vunpack.c.h.b16 %v118
    %v395 = vunpack.c.l.b16 %v119
    %v396 = vunpack.c.h.b16 %v119
    %v397 = vunpack.c.l.b16 %v120
    %v398 = vunpack.c.h.b16 %v120
    %v399 = vunpack.c.l.b16 %v121
    %v400 = vunpack.c.h.b16 %v121
    %v401 = vunpack.c.l.b16 %v122
    %v402 = vunpack.c.h.b16 %v122
    %v403 = vunpack.c.l.b16 %v123
    %v404 = vunpack.c.h.b16 %v123
    %v405 = vunpack.c.l.b16 %v124
    %v406 = vunpack.c.h.b16 %v124
    %v407 = vunpack.c.l.b16 %v125
    %v408 = vunpack.c.h.b16 %v125
    %v409 = vunpack.c.l.b16 %v126
    %v410 = vunpack.c.h.b16 %v126
    %v411 = vunpack.c.l.b16 %v127
    %v412 = vunpack.c.h.b16 %v127
    %v413 = vunpack.c.l.b16 %v128
    %v414 = vunpack.c.h.b16 %v128
    %v415 = vunpack.c.l.b16 %v129
    %v416 = vunpack.c.h.b16 %v129
    %v417 = vunpack.c.l.b16 %v130
    %v418 = vunpack.c.h.b16 %v130
    %v419 = vunpack.c.l.b16 %v131
    %v420 = vunpack.c.h.b16 %v131
    %v421 = vunpack.c.l.b16 %v132
    %v422 = vunpack.c.h.b16 %v132
    %v423 = vunpack.c.l.b16 %v133
    %v424 = vunpack.c.h.b16 %v133
    %v425 = vunpack.c.l.b16 %v134
    %v426 = vunpack.c.h.b16 %v134
    %v427 = vunpack.c.l.b16 %v135
    %v428 = vunpack.c.h.b16 %v135
    %v429 = vunpack.c.l.b16 %v136
    %v430 = vunpack.c.h.b16 %v136
    %v431 = vunpack.c.l.b16 %v137
    %v432 = vunpack.c.h.b16 %v137
    %v433 = vunpack.c.l.b16 %v138
    %v434 = vunpack.c.h.b16 %v138
    %v435 = vunpack.c.l.b16 %v139
    %v436 = vunpack.c.h.b16 %v139
    %v437 = vunpack.c.l.b16 %v140
    %v438 = vunpack.c.h.b16 %v140
    %v439 = vunpack.c.l.b16 %v141
    %v440 = vunpack.c.h.b16 %v141
    %v441 = vunpack.c.l.b16 %v142
    %v442 = vunpack.c.h.b16 %v142
    %v443 = vunpack.c.l.b16 %v143
    %v444 = vunpack.c.h.b16 %v143
    %v445 = vunpack.c.l.b16 %v144
    %v446 = vunpack.c.h.b16 %v144
    %v447 = vunpack.c.l.b16 %v145
    %v448 = vunpack.c.h.b16 %v145
    %v449 = vunpack.c.l.b16 %v146
    %v450 = vunpack.c.h.b16 %v146
    %v451 = vunpack.c.l.b16 %v147
    %v452 = vunpack.c.h.b16 %v147
    %v453 = vunpack.c.l.b16 %v148
    %v454 = vunpack.c.h.b16 %v148
    %v455 = vunpack.c.l.b16 %v149
    %v456 = vunpack.c.h.b16 %v149
    %v457 = vunpack.c.l.b16 %v150
    %v458 = vunpack.c.h.b16 %v150
    %v459 = vunpack.c.l.b16 %v151
    %v460 = vunpack.c.h.b16 %v151
    %v461 = vunpack.c.l.b16 %v152
    %v462 = vunpack.c.h.b16 %v152
    %v463 = vunpack.c.l.b16 %v153
    %v464 = vunpack.c.h.b16 %v153
    %v465 = vunpack.c.l.b16 %v154
    %v466 = vunpack.c.h.b16 %v154
    %v467 = vunpack.c.l.b16 %v155
    %v468 = vunpack.c.h.b16 %v155
    %v469 = vunpack.c.l.b16 %v156
    %v470 = vunpack.c.h.b16 %v156
    %v471 = vunpack.c.l.b16 %v157
    %v472 = vunpack.c.h.b16 %v157
    %v473 = vunpack.c.l.b16 %v158
    %v474 = vunpack.c.h.b16 %v158
    %v475 = vunpack.c.l.b16 %v159
    %v476 = vunpack.c.h.b16 %v159
    %v477 = vunpack.c.l.b16 %v160
    %v478 = vunpack.c.h.b16 %v160
    %v479 = vunpack.c.l.b16 %v161
    %v480 = vunpack.c.h.b16 %v161
    %v481 = vunpack.c.l.b16 %v162
    %v482 = vunpack.c.h.b16 %v162
    %v483 = vunpack.c.l.b16 %v163
    %v484 = vunpack.c.h.b16 %v163
    %v485 = vunpack.c.l.b16 %v164
    %v486 = vunpack.c.h.b16 %v164
    %v487 = vunpack.c.l.b16 %v165
    %v488 = vunpack.c.h.b16 %v165
    %v489 = vunpack.c.l.b16 %v166
    %v490 = vunpack.c.h.b16 %v166
    %v491 = vunpack.c.l.b16 %v167
    %v492 = vunpack.c.h.b16 %v167
    %v493 = vunpack.c.l.b16 %v168
    %v494 = vunpack.c.h.b16 %v168
    %v495 = vunpack.c.l.b16 %v169
    %v496 = vunpack.c.h.b16 %v169
    %v497 = vunpack.c.l.b16 %v170
    %v498 = vunpack.c.h.b16 %v170
    %v499 = vunpack.c.l.b16 %v171
    %v500 = vunpack.c.h.b16 %v171
    %v501 = vunpack.c.l.b16 %v172
    %v502 = vunpack.c.h.b16 %v172
    %v503 = vunpack.c.l.b16 %v173
    %v504 = vunpack.c.h.b16 %v173
    %v505 = vunpack.c.l.b16 %v174
    %v506 = vunpack.c.h.b16 %v174
    %v507 = vunpack.c.l.b16 %v175
    %v508 = vunpack.c.h.b16 %v175
    %v509 = vunpack.c.l.b16 %v176
    %v510 = vunpack.c.h.b16 %v176
    %v511 = vunpack.c.l.b16 %v177
    %v512 = vunpack.c.h.b16 %v177
    %v513 = vunpack.c.l.b16 %v178
    %v514 = vunpack.c.h.b16 %v178
    %v515 = vunpack.c.l.b16 %v179
    %v516 = vunpack.c.h.b16 %v179
    %v517 = vunpack.c.l.b16 %v180
    %v518 = vunpack.c.h.b16 %v180
    %v519 = vunpack.c.l.b16 %v181
    %v520 = vunpack.c.h.b16 %v181
    %v521 = vunpack.c.l.b16 %v182
    %v522 = vunpack.c.h.b16 %v182
    %v523 = vunpack.c.l.b16 %v183
    %v524 = vunpack.c.h.b16 %v183
    %v525 = vunpack.c.l.b16 %v184
    %v526 = vunpack.c.h.b16 %v184
    %v527 = vunpack.c.l.b16 %v185
    %v528 = vunpack.c.h.b16 %v185
    %v529 = vunpack.c.l.b16 %v186
    %v530 = vunpack.c.h.b16 %v186
    %v531 = vunpack.c.l.b16 %v187
    %v532 = vunpack.c.h.b16 %v187
    %v533 = vunpack.c.l.b16 %v188
    %v534 = vunpack.c.h.b16 %v188
    %v535 = vunpack.c.l.b16 %v189
    %v536 = vunpack.c.h.b16 %v189
    %v537 = vunpack.c.l.b16 %v190
    %v538 = vunpack.c.h.b16 %v190
    %v539 = vunpack.c.l.b16 %v191
    %v540 = vunpack.c.h.b16 %v191
    %v541 = vunpack.c.l.b16 %v192
    %v542 = vunpack.c.h.b16 %v192
    %v543 = vunpack.c.l.b16 %v193
    %v544 = vunpack.c.h.b16 %v193
    %v545 = vunpack.c.l.b16 %v194
    %v546 = vunpack.c.h.b16 %v194
    %v547 = vunpack.c.l.b16 %v195
    %v548 = vunpack.c.h.b16 %v195
    %v549 = vunpack.c.l.b16 %v196
    %v550 = vunpack.c.h.b16 %v196
    %v551 = vunpack.c.l.b16 %v197
    %v552 = vunpack.c.h.b16 %v197
    %v553 = vunpack.c.l.b16 %v198
    %v554 = vunpack.c.h.b16 %v198
    %v555 = vunpack.c.l.b16 %v199
    %v556 = vunpack.c.h.b16 %v199
    %v557 = vunpack.c.l.b16 %v200
    %v558 = vunpack.c.h.b16 %v200
    %v559 = vunpack.c.l.b16 %v201
    %v560 = vunpack.c.h.b16 %v201
    %v561 = vunpack.c.l.b16 %v202
    %v562 = vunpack.c.h.b16 %v202
    %v563 = vunpack.c.l.b16 %v203
    %v564 = vunpack.c.h.b16 %v203
    %v565 = vunpack.c.l.b16 %v204
    %v566 = vunpack.c.h.b16 %v204
    %v567 = vunpack.c.l.b16 %v205
    %v568 = vunpack.c.h.b16 %v205
    %v569 = vunpack.c.l.b16 %v206
    %v570 = vunpack.c.h.b16 %v206
    %v571 = vunpack.c.l.b16 %v207
    %v572 = vunpack.c.h.b16 %v207
    %v573 = vunpack.c.l.b16 %v208
    %v574 = vunpack.c.h.b16 %v208
    %v575 = vunpack.c.l.b16 %v209
    %v576 = vunpack.c.h.b16 %v209
    %v577 = vunpack.c.l.b16 %v210
    %v578 = vunpack.c.h.b16 %v210
    %v579 = vunpack.c.l.b16 %v211
    %v580 = vunpack.c.h.b16 %v211
    %v581 = vunpack.c.l.b16 %v212
    %v582 = vunpack.c.h.b16 %v212
    %v583 = vunpack.c.l.b16 %v213
    %v584 = vunpack.c.h.b16 %v213
    %v585 = vunpack.c.l.b16 %v214
    %v586 = vunpack.c.h.b16 %v214
    %v587 = vunpack.c.l.b16 %v215
    %v588 = vunpack.c.h.b16 %v215
    %v589 = vunpack.c.l.b16 %v216
    %v590 = vunpack.c.h.b16 %v216
    %v591 = vunpack.c.l.b16 %v217
    %v592 = vunpack.c.h.b16 %v217
    %v593 = vunpack.c.l.b16 %v218
    %v594 = vunpack.c.h.b16 %v218
    %v595 = vunpack.c.l.b16 %v219
    %v596 = vunpack.c.h.b16 %v219
    %v597 = vunpack.c.l.b16 %v220
    %v598 = vunpack.c.h.b16 %v220
    %v599 = vunpack.c.l.b16 %v221
    %v600 = vunpack.c.h.b16 %v221
    %v601 = vunpack.c.l.b16 %v222
    %v602 = vunpack.c.h.b16 %v222
    %v603 = vunpack.c.l.b16 %v223
    %v604 = vunpack.c.h.b16 %v223
    %v605 = vunpack.c.l.b16 %v224
    %v606 = vunpack.c.h.b16 %v224
    %v607 = vunpack.c.l.b16 %v225
    %v608 = vunpack.c.h.b16 %v225
    %v609 = vunpack.c.l.b16 %v226
    %v610 = vunpack.c.h.b16 %v226
    %v611 = vpack.c.b16 %v357, %v355
    %v612 = vpack.c.b16 %v358, %v356
    %v613 = vpack.c.b16 %v361, %v359
    %v614 = vpack.c.b16 %v362, %v360
    %v615 = vpack.c.b16 %v365, %v363
    %v616 = vpack.c.b16 %v366, %v364
    %v617 = vpack.c.b16 %v369, %v367
    %v618 = vpack.c.b16 %v370, %v368
    %v619 = vpack.c.b16 %v373, %v371
    %v620 = vpack.c.b16 %v374, %v372
    %v621 = vpack.c.b16 %v377, %v375
    %v622 = vpack.c.b16 %v378, %v376
    %v623 = vpack.c.b16 %v381, %v379
    %v624 = vpack.c.b16 %v382, %v380
    %v625 = vpack.c.b16 %v385, %v383
    %v626 = vpack.c.b16 %v386, %v384
    %v627 = vpack.c.b16 %v389, %v387
    %v628 = vpack.c.b16 %v390, %v388
    %v629 = vpack.c.b16 %v393, %v391
    %v630 = vpack.c.b16 %v394, %v392
    %v631 = vpack.c.b16 %v397, %v395
    %v632 = vpack.c.b16 %v398, %v396
    %v633 = vpack.c.b16 %v401, %v399
    %v634 = vpack.c.b16 %v402, %v400
    %v635 = vpack.c.b16 %v405, %v403
    %v636 = vpack.c.b16 %v406, %v404
    %v637 = vpack.c.b16 %v409, %v407
    %v638 = vpack.c.b16 %v410, %v408
    %v639 = vpack.c.b16 %v413, %v411
    %v640 = vpack.c.b16 %v414, %v412
    %v641 = vpack.c.b16 %v417, %v415
    %v642 = vpack.c.b16 %v418, %v416
    %v643 = vpack.c.b16 %v421, %v419
    %v644 = vpack.c.b16 %v422, %v420
    %v645 = vpack.c.b16 %v425, %v423
    %v646 = vpack.c.b16 %v426, %v424
    %v647 = vpack.c.b16 %v429, %v427
    %v648 = vpack.c.b16 %v430, %v428
    %v649 = vpack.c.b16 %v433, %v431
    %v650 = vpack.c.b16 %v434, %v432
    %v651 = vpack.c.b16 %v437, %v435
    %v652 = vpack.c.b16 %v438, %v436
    %v653 = vpack.c.b16 %v441, %v439
    %v654 = vpack.c.b16 %v442, %v440
    %v655 = vpack.c.b16 %v445, %v443
    %v656 = vpack.c.b16 %v446, %v444
    %v657 = vpack.c.b16 %v449, %v447
    %v658 = vpack.c.b16 %v450, %v448
    %v659 = vpack.c.b16 %v453, %v451
    %v660 = vpack.c.b16 %v454, %v452
    %v661 = vpack.c.b16 %v457, %v455
    %v662 = vpack.c.b16 %v458, %v456
    %v663 = vpack.c.b16 %v461, %v459
    %v664 = vpack.c.b16 %v462, %v460
    %v665 = vpack.c.b16 %v465, %v463
    %v666 = vpack.c.b16 %v466, %v464
    %v667 = vpack.c.b16 %v469, %v467
    %v668 = vpack.c.b16 %v470, %v468
    %v669 = vpack.c.b16 %v473, %v471
    %v670 = vpack.c.b16 %v474, %v472
    %v671 = vpack.c.b16 %v477, %v475
    %v672 = vpack.c.b16 %v478, %v476
    %v673 = vpack.c.b16 %v481, %v479
    %v674 = vpack.c.b16 %v482, %v480
    %v675 = vpack.c.b16 %v485, %v483
    %v676 = vpack.c.b16 %v486, %v484
    %v677 = vpack.c.b16 %v489, %v487
    %v678 = vpack.c.b16 %v490, %v488
    %v679 = vpack.c.b16 %v493, %v491
    %v680 = vpack.c.b16 %v494, %v492
    %v681 = vpack.c.b16 %v497, %v495
    %v682 = vpack.c.b16 %v498, %v496
    %v683 = vpack.c.b16 %v501, %v499
    %v684 = vpack.c.b16 %v502, %v500
    %v685 = vpack.c.b16 %v505, %v503
    %v686 = vpack.c.b16 %v506, %v504
    %v687 = vpack.c.b16 %v509, %v507
    %v688 = vpack.c.b16 %v510, %v508
    %v689 = vpack.c.b16 %v513, %v511
    %v690 = vpack.c.b16 %v514, %v512
    %v691 = vpack.c.b16 %v517, %v515
    %v692 = vpack.c.b16 %v518, %v516
    %v693 = vpack.c.b16 %v521, %v519
    %v694 = vpack.c.b16 %v522, %v520
    %v695 = vpack.c.b16 %v525, %v523
    %v696 = vpack.c.b16 %v526, %v524
    %v697 = vpack.c.b16 %v529, %v527
    %v698 = vpack.c.b16 %v530, %v528
    %v699 = vpack.c.b16 %v533, %v531
    %v700 = vpack.c.b16 %v534, %v532
    %v701 = vpack.c.b16 %v537, %v535
    %v702 = vpack.c.b16 %v538, %v536
    %v703 = vpack.c.b16 %v541, %v539
    %v704 = vpack.c.b16 %v542, %v540
    %v705 = vpack.c.b16 %v545, %v543
    %v706 = vpack.c.b16 %v546, %v544
    %v707 = vpack.c.b16 %v549, %v547
    %v708 = vpack.c.b16 %v550, %v548
    %v709 = vpack.c.b16 %v553, %v551
    %v710 = vpack.c.b16 %v554, %v552
    %v711 = vpack.c.b16 %v557, %v555
    %v712 = vpack.c.b16 %v558, %v556
    %v713 = vpack.c.b16 %v561, %v559
    %v714 = vpack.c.b16 %v562, %v560
    %v715 = vpack.c.b16 %v565, %v563
    %v716 = vpack.c.b16 %v566, %v564
    %v717 = vpack.c.b16 %v569, %v567
    %v718 = vpack.c.b16 %v570, %v568
    %v719 = vpack.c.b16 %v573, %v571
    %v720 = vpack.c.b16 %v574, %v572
    %v721 = vpack.c.b16 %v577, %v575
    %v722 = vpack.c.b16 %v578, %v576
    %v723 = vpack.c.b16 %v581, %v579
    %v724 = vpack.c.b16 %v582, %v580
    %v725 = vpack.c.b16 %v585, %v583
    %v726 = vpack.c.b16 %v586, %v584
    %v727 = vpack.c.b16 %v589, %v587
    %v728 = vpack.c.b16 %v590, %v588
    %v729 = vpack.c.b16 %v593, %v591
    %v730 = vpack.c.b16 %v594, %v592
    %v731 = vpack.c.b16 %v597, %v595
    %v732 = vpack.c.b16 %v598, %v596
    %v733 = vpack.c.b16 %v601, %v599
    %v734 = vpack.c.b16 %v602, %v600
    %v735 = vpack.c.b16 %v605, %v603
    %v736 = vpack.c.b16 %v606, %v604
    %v737 = vpack.c.b16 %v609, %v607
    %v738 = vpack.c.b16 %v610, %v608
    %867 = vmatprep.subr.bf16.mxu0 %v612
    %868 = vmatpush1.bf16.msra.mxu0 %v611
    %869 = vmatprep.subr.bf16.mxu0 %v614
    %870 = vmatpush1.bf16.msra.mxu0 %v613
    %871 = vmatprep.subr.bf16.mxu0 %v616
    %872 = vmatpush1.bf16.msra.mxu0 %v615
    %873 = vmatprep.subr.bf16.mxu0 %v618
    %874 = vmatpush1.bf16.msra.mxu0 %v617
    %875 = vmatprep.subr.bf16.mxu0 %v620
    %876 = vmatpush1.bf16.msra.mxu0 %v619
    %877 = vmatprep.subr.bf16.mxu0 %v622
    %878 = vmatpush1.bf16.msra.mxu0 %v621
    %879 = vmatprep.subr.bf16.mxu0 %v624
    %880 = vmatpush1.bf16.msra.mxu0 %v623
    %881 = vmatprep.subr.bf16.mxu0 %v626
    %882 = vmatpush1.bf16.msra.mxu0 %v625
    %883 = vmatprep.subr.bf16.mxu0 %v628
    %884 = vmatpush1.bf16.msra.mxu0 %v627
    %885 = vmatprep.subr.bf16.mxu0 %v630
    %886 = vmatpush1.bf16.msra.mxu0 %v629
    %887 = vmatprep.subr.bf16.mxu0 %v632
    %888 = vmatpush1.bf16.msra.mxu0 %v631
    %889 = vmatprep.subr.bf16.mxu0 %v634
    %890 = vmatpush1.bf16.msra.mxu0 %v633
    %891 = vmatprep.subr.bf16.mxu0 %v636
    %892 = vmatpush1.bf16.msra.mxu0 %v635
    %893 = vmatprep.subr.bf16.mxu0 %v638
    %894 = vmatpush1.bf16.msra.mxu0 %v637
    %895 = vmatprep.subr.bf16.mxu0 %v640
    %896 = vmatpush1.bf16.msra.mxu0 %v639
    %897 = vmatprep.subr.bf16.mxu0 %v642
    %898 = vmatpush1.bf16.msra.mxu0 %v641
    %899 = vmatprep.mubr.bf16.mxu0 %v88
    %900 = vmatmul.mubr.bf16.gmra.mrb[0].mxu0 %v87
    %v901 = vpop.f32.mrb[0].mxu0
    %v902 = vadd.f32 0.0, %v901
    %v903 = vpop.f32.mrb[0].mxu0
    %v904 = vadd.f32 0.0, %v903
    %v905 = vpop.f32.mrb[0].mxu0
    %v906 = vadd.f32 0.0, %v905
    %v907 = vpop.f32.mrb[0].mxu0
    %v908 = vadd.f32 0.0, %v907
    %909 = vdwg.mxu0
    %910 = vmatprep.subr.bf16.mxu0 %v644
    %911 = vmatpush1.bf16.msra.mxu0 %v643
    %912 = vmatprep.subr.bf16.mxu0 %v646
    %913 = vmatpush1.bf16.msra.mxu0 %v645
    %914 = vmatprep.subr.bf16.mxu0 %v648
    %915 = vmatpush1.bf16.msra.mxu0 %v647
    %916 = vmatprep.subr.bf16.mxu0 %v650
    %917 = vmatpush1.bf16.msra.mxu0 %v649
    %918 = vmatprep.subr.bf16.mxu0 %v652
    %919 = vmatpush1.bf16.msra.mxu0 %v651
    %920 = vmatprep.subr.bf16.mxu0 %v654
    %921 = vmatpush1.bf16.msra.mxu0 %v653
    %922 = vmatprep.subr.bf16.mxu0 %v656
    %923 = vmatpush1.bf16.msra.mxu0 %v655
    %924 = vmatprep.subr.bf16.mxu0 %v658
    %925 = vmatpush1.bf16.msra.mxu0 %v657
    %926 = vmatprep.subr.bf16.mxu0 %v660
    %927 = vmatpush1.bf16.msra.mxu0 %v659
    %928 = vmatprep.subr.bf16.mxu0 %v662
    %929 = vmatpush1.bf16.msra.mxu0 %v661
    %930 = vmatprep.subr.bf16.mxu0 %v664
    %931 = vmatpush1.bf16.msra.mxu0 %v663
    %932 = vmatprep.subr.bf16.mxu0 %v666
    %933 = vmatpush1.bf16.msra.mxu0 %v665
    %934 = vmatprep.subr.bf16.mxu0 %v668
    %935 = vmatpush1.bf16.msra.mxu0 %v667
    %936 = vmatprep.subr.bf16.mxu0 %v670
    %937 = vmatpush1.bf16.msra.mxu0 %v669
    %938 = vmatprep.subr.bf16.mxu0 %v672
    %939 = vmatpush1.bf16.msra.mxu0 %v671
    %940 = vmatprep.subr.bf16.mxu0 %v674
    %941 = vmatpush1.bf16.msra.mxu0 %v673
    %942 = vmatprep.mubr.bf16.mxu0 %v90
    %943 = vmatmul.mubr.bf16.gmra.mrb[0].mxu0 %v89
    %v944 = vpop.f32.mrb[0].mxu0
    %v945 = vadd.f32 %v902, %v944
    %v946 = vpop.f32.mrb[0].mxu0
    %v947 = vadd.f32 %v904, %v946
    %v948 = vpop.f32.mrb[0].mxu0
    %v949 = vadd.f32 %v906, %v948
    %v950 = vpop.f32.mrb[0].mxu0
    %v951 = vadd.f32 %v908, %v950
    %952 = vdwg.mxu0
    %953 = vmatprep.subr.bf16.mxu0 %v676
    %954 = vmatpush1.bf16.msra.mxu0 %v675
    %955 = vmatprep.subr.bf16.mxu0 %v678
    %956 = vmatpush1.bf16.msra.mxu0 %v677
    %957 = vmatprep.subr.bf16.mxu0 %v680
    %958 = vmatpush1.bf16.msra.mxu0 %v679
    %959 = vmatprep.subr.bf16.mxu0 %v682
    %960 = vmatpush1.bf16.msra.mxu0 %v681
    %961 = vmatprep.subr.bf16.mxu0 %v684
    %962 = vmatpush1.bf16.msra.mxu0 %v683
    %963 = vmatprep.subr.bf16.mxu0 %v686
    %964 = vmatpush1.bf16.msra.mxu0 %v685
    %965 = vmatprep.subr.bf16.mxu0 %v688
    %966 = vmatpush1.bf16.msra.mxu0 %v687
    %967 = vmatprep.subr.bf16.mxu0 %v690
    %968 = vmatpush1.bf16.msra.mxu0 %v689
    %969 = vmatprep.subr.bf16.mxu0 %v692
    %970 = vmatpush1.bf16.msra.mxu0 %v691
    %971 = vmatprep.subr.bf16.mxu0 %v694
    %972 = vmatpush1.bf16.msra.mxu0 %v693
    %973 = vmatprep.subr.bf16.mxu0 %v696
    %974 = vmatpush1.bf16.msra.mxu0 %v695
    %975 = vmatprep.subr.bf16.mxu0 %v698
    %976 = vmatpush1.bf16.msra.mxu0 %v697
    %977 = vmatprep.subr.bf16.mxu0 %v700
    %978 = vmatpush1.bf16.msra.mxu0 %v699
    %979 = vmatprep.subr.bf16.mxu0 %v702
    %980 = vmatpush1.bf16.msra.mxu0 %v701
    %981 = vmatprep.subr.bf16.mxu0 %v704
    %982 = vmatpush1.bf16.msra.mxu0 %v703
    %983 = vmatprep.subr.bf16.mxu0 %v706
    %984 = vmatpush1.bf16.msra.mxu0 %v705
    %985 = vmatprep.mubr.bf16.mxu0 %v92
    %986 = vmatmul.mubr.bf16.gmra.mrb[0].mxu0 %v91
    %v987 = vpop.f32.mrb[0].mxu0
    %v988 = vadd.f32 %v945, %v987
    %v989 = vpop.f32.mrb[0].mxu0
    %v990 = vadd.f32 %v947, %v989
    %v991 = vpop.f32.mrb[0].mxu0
    %v992 = vadd.f32 %v949, %v991
    %v993 = vpop.f32.mrb[0].mxu0
    %v994 = vadd.f32 %v951, %v993
    %995 = vdwg.mxu0
    %996 = vmatprep.subr.bf16.mxu0 %v708
    %997 = vmatpush1.bf16.msra.mxu0 %v707
    %998 = vmatprep.subr.bf16.mxu0 %v710
    %999 = vmatpush1.bf16.msra.mxu0 %v709
    %1000 = vmatprep.subr.bf16.mxu0 %v712
    %1001 = vmatpush1.bf16.msra.mxu0 %v711
    %1002 = vmatprep.subr.bf16.mxu0 %v714
    %1003 = vmatpush1.bf16.msra.mxu0 %v713
    %1004 = vmatprep.subr.bf16.mxu0 %v716
    %1005 = vmatpush1.bf16.msra.mxu0 %v715
    %1006 = vmatprep.subr.bf16.mxu0 %v718
    %1007 = vmatpush1.bf16.msra.mxu0 %v717
    %1008 = vmatprep.subr.bf16.mxu0 %v720
    %1009 = vmatpush1.bf16.msra.mxu0 %v719
    %1010 = vmatprep.subr.bf16.mxu0 %v722
    %1011 = vmatpush1.bf16.msra.mxu0 %v721
    %1012 = vmatprep.subr.bf16.mxu0 %v724
    %1013 = vmatpush1.bf16.msra.mxu0 %v723
    %1014 = vmatprep.subr.bf16.mxu0 %v726
    %1015 = vmatpush1.bf16.msra.mxu0 %v725
    %1016 = vmatprep.subr.bf16.mxu0 %v728
    %1017 = vmatpush1.bf16.msra.mxu0 %v727
    %1018 = vmatprep.subr.bf16.mxu0 %v730
    %1019 = vmatpush1.bf16.msra.mxu0 %v729
    %1020 = vmatprep.subr.bf16.mxu0 %v732
    %1021 = vmatpush1.bf16.msra.mxu0 %v731
    %1022 = vmatprep.subr.bf16.mxu0 %v734
    %1023 = vmatpush1.bf16.msra.mxu0 %v733
    %1024 = vmatprep.subr.bf16.mxu0 %v736
    %1025 = vmatpush1.bf16.msra.mxu0 %v735
    %1026 = vmatprep.subr.bf16.mxu0 %v738
    %1027 = vmatpush1.bf16.msra.mxu0 %v737
    %1028 = vmatprep.mubr.bf16.mxu0 %v94
    %1029 = vmatmul.mubr.bf16.gmra.mrb[0].mxu0 %v93
    %v1030 = vpop.f32.mrb[0].mxu0
    %v1031 = vadd.f32 %v988, %v1030
    %v1032 = vpop.f32.mrb[0].mxu0
    %v1033 = vadd.f32 %v990, %v1032
    %v1034 = vpop.f32.mrb[0].mxu0
    %v1035 = vadd.f32 %v992, %v1034
    %v1036 = vpop.f32.mrb[0].mxu0
    %v1037 = vadd.f32 %v994, %v1036
    %1038 = vdwg.mxu0
    %v1039 = vadd.f32 %v95, %v1031
    %v1040 = vadd.f32 %v96, %v1033
    %v1041 = vadd.f32 %v97, %v1035
    %v1042 = vadd.f32 %v98, %v1037
    %1043 = vst [vmem:[#allocation2] sm:$0xff] %v1039
    %1044 = vst [vmem:[#allocation2 + $0x8] sm:$0xff] %v1040
    %1045 = vst [vmem:[#allocation2 + $0x10] sm:$0xff] %v1041
    %1046 = vst [vmem:[#allocation2 + $0x18] sm:$0xff] %v1042
    // Predicated region
    $region38: #{tpu_custom_call.1} parent=1 // pred_check
      %p1047 = pneg %p63
    $region39: #{tpu_custom_call.1} parent=1 // pred_check_branch
      %1049 = sbr.rel (%p1047) target = $region41
    $region40: #{tpu_custom_call.1} parent=1 // pred_region
      %v1050 = vld [vmem:[#allocation2] sm:$0xff]
      %v1051 = vld [vmem:[#allocation2 + $0x8] sm:$0xff]
      %v1052 = vld [vmem:[#allocation2 + $0x10] sm:$0xff]
      %v1053 = vld [vmem:[#allocation2 + $0x18] sm:$0xff]
      %v1054 = vld [vmem:[%s2] sm:$0x3]
      %v1056 = vlaneseq
      %v1057 = vshrl.u32 %v1056, 7
      %v1058 = vsub.s32 0, %v1057
      %v1059 = vrot.slane %v1054, %v1058
      %v1060 = vlaneseq
      %v1061 = vshrl.u32 %v1060, 7
      %v1062 = vsub.s32 1, %v1061
      %v1063 = vrot.slane %v1054, %v1062
      %v1066 = vadd.f32 %v1050, %v1059
      %v1067 = vadd.f32 %v1051, %v1063
      %v1068 = vadd.f32 %v1052, %v1059
      %v1069 = vadd.f32 %v1053, %v1063
      %v1070 = vmax.f32 %v1066, 0.0
      %v1071 = vmax.f32 %v1067, 0.0
      %v1072 = vmax.f32 %v1068, 0.0
      %v1073 = vmax.f32 %v1069, 0.0
      %v1074 = vpack.c.bf16 %v1073, %v1071
      %v1075 = vld [vmem:[#allocation8] sm:$0xff]
      %v1076 = vld [vmem:[#allocation8 + $0x8] sm:$0xf]
      %v1077 = vld [vmem:[#allocation8 + $0xc] sm:$0xff]
      %v1078 = vld [vmem:[#allocation8 + $0x14] sm:$0xf]
      %v1079 = vld [vmem:[#allocation8 + $0x18] sm:$0xff]
      %v1080 = vld [vmem:[#allocation8 + $0x20] sm:$0xf]
      %v1081 = vld [vmem:[#allocation8 + $0x24] sm:$0xff]
      %v1082 = vld [vmem:[#allocation8 + $0x2c] sm:$0xf]
      %v1083 = vld [vmem:[#allocation8 + $0x30] sm:$0xff]
      %v1084 = vld [vmem:[#allocation8 + $0x38] sm:$0xf]
      %v1085 = vld [vmem:[#allocation8 + $0x3c] sm:$0xff]
      %v1086 = vld [vmem:[#allocation8 + $0x44] sm:$0xf]
      %v1087 = vld [vmem:[#allocation8 + $0x48] sm:$0xff]
      %v1088 = vld [vmem:[#allocation8 + $0x50] sm:$0xf]
      %v1089 = vld [vmem:[#allocation8 + $0x54] sm:$0xff]
      %v1090 = vld [vmem:[#allocation8 + $0x5c] sm:$0xf]
      %v1091 = vld [vmem:[#allocation8 + $0x60] sm:$0xff]
      %v1092 = vld [vmem:[#allocation8 + $0x68] sm:$0xf]
      %v1093 = vld [vmem:[#allocation8 + $0x6c] sm:$0xff]
      %v1094 = vld [vmem:[#allocation8 + $0x74] sm:$0xf]
      %v1095 = vld [vmem:[#allocation8 + $0x78] sm:$0xff]
      %v1096 = vld [vmem:[#allocation8 + $0x80] sm:$0xf]
      %v1097 = vld [vmem:[#allocation8 + $0x84] sm:$0xff]
      %v1098 = vld [vmem:[#allocation8 + $0x8c] sm:$0xf]
      %v1099 = vld [vmem:[#allocation8 + $0x90] sm:$0xff]
      %v1100 = vld [vmem:[#allocation8 + $0x98] sm:$0xf]
      %v1101 = vld [vmem:[#allocation8 + $0x9c] sm:$0xff]
      %v1102 = vld [vmem:[#allocation8 + $0xa4] sm:$0xf]
      %v1103 = vld [vmem:[#allocation8 + $0xa8] sm:$0xff]
      %v1104 = vld [vmem:[#allocation8 + $0xb0] sm:$0xf]
      %v1105 = vld [vmem:[#allocation8 + $0xb4] sm:$0xff]
      %v1106 = vld [vmem:[#allocation8 + $0xbc] sm:$0xf]
      %v1107 = vld [vmem:[%s4] sm:$0x7]
      %v1109 = vlaneseq
      %v1110 = vshrl.u32 %v1109, 7
      %v1111 = vsub.s32 0, %v1110
      %v1112 = vrot.slane %v1107, %v1111
      %v1113 = vlaneseq
      %v1114 = vshrl.u32 %v1113, 7
      %v1115 = vsub.s32 1, %v1114
      %v1116 = vrot.slane %v1107, %v1115
      %v1117 = vlaneseq
      %v1118 = vshrl.u32 %v1117, 7
      %v1119 = vsub.s32 2, %v1118
      %v1120 = vrot.slane %v1107, %v1119
      %v1156 = vunpack.c.l.b16 %v1075
      %v1157 = vunpack.c.h.b16 %v1075
      %v1158 = vunpack.c.l.b16 %v1076
      %v1159 = vunpack.c.l.b16 %v1077
      %v1160 = vunpack.c.h.b16 %v1077
      %v1161 = vunpack.c.l.b16 %v1078
      %v1162 = vunpack.c.l.b16 %v1079
      %v1163 = vunpack.c.h.b16 %v1079
      %v1164 = vunpack.c.l.b16 %v1080
      %v1165 = vunpack.c.l.b16 %v1081
      %v1166 = vunpack.c.h.b16 %v1081
      %v1167 = vunpack.c.l.b16 %v1082
      %v1168 = vunpack.c.l.b16 %v1083
      %v1169 = vunpack.c.h.b16 %v1083
      %v1170 = vunpack.c.l.b16 %v1084
      %v1171 = vunpack.c.l.b16 %v1085
      %v1172 = vunpack.c.h.b16 %v1085
      %v1173 = vunpack.c.l.b16 %v1086
      %v1174 = vunpack.c.l.b16 %v1087
      %v1175 = vunpack.c.h.b16 %v1087
      %v1176 = vunpack.c.l.b16 %v1088
      %v1177 = vunpack.c.l.b16 %v1089
      %v1178 = vunpack.c.h.b16 %v1089
      %v1179 = vunpack.c.l.b16 %v1090
      %v1180 = vunpack.c.l.b16 %v1091
      %v1181 = vunpack.c.h.b16 %v1091
      %v1182 = vunpack.c.l.b16 %v1092
      %v1183 = vunpack.c.l.b16 %v1093
      %v1184 = vunpack.c.h.b16 %v1093
      %v1185 = vunpack.c.l.b16 %v1094
      %v1186 = vunpack.c.l.b16 %v1095
      %v1187 = vunpack.c.h.b16 %v1095
      %v1188 = vunpack.c.l.b16 %v1096
      %v1189 = vunpack.c.l.b16 %v1097
      %v1190 = vunpack.c.h.b16 %v1097
      %v1191 = vunpack.c.l.b16 %v1098
      %v1192 = vunpack.c.l.b16 %v1099
      %v1193 = vunpack.c.h.b16 %v1099
      %v1194 = vunpack.c.l.b16 %v1100
      %v1195 = vunpack.c.l.b16 %v1101
      %v1196 = vunpack.c.h.b16 %v1101
      %v1197 = vunpack.c.l.b16 %v1102
      %v1198 = vunpack.c.l.b16 %v1103
      %v1199 = vunpack.c.h.b16 %v1103
      %v1200 = vunpack.c.l.b16 %v1104
      %v1201 = vunpack.c.l.b16 %v1105
      %v1202 = vunpack.c.h.b16 %v1105
      %v1203 = vunpack.c.l.b16 %v1106
      %v1204 = vpack.c.b16 %v1159, %v1156
      %v1205 = vpack.c.b16 %v1160, %v1157
      %v1206 = vpack.c.b16 %v1161, %v1158
      %v1207 = vpack.c.b16 %v1165, %v1162
      %v1208 = vpack.c.b16 %v1166, %v1163
      %v1209 = vpack.c.b16 %v1167, %v1164
      %v1210 = vpack.c.b16 %v1171, %v1168
      %v1211 = vpack.c.b16 %v1172, %v1169
      %v1212 = vpack.c.b16 %v1173, %v1170
      %v1213 = vpack.c.b16 %v1177, %v1174
      %v1214 = vpack.c.b16 %v1178, %v1175
      %v1215 = vpack.c.b16 %v1179, %v1176
      %v1216 = vpack.c.b16 %v1183, %v1180
      %v1217 = vpack.c.b16 %v1184, %v1181
      %v1218 = vpack.c.b16 %v1185, %v1182
      %v1219 = vpack.c.b16 %v1189, %v1186
      %v1220 = vpack.c.b16 %v1190, %v1187
      %v1221 = vpack.c.b16 %v1191, %v1188
      %v1222 = vpack.c.b16 %v1195, %v1192
      %v1223 = vpack.c.b16 %v1196, %v1193
      %v1224 = vpack.c.b16 %v1197, %v1194
      %v1225 = vpack.c.b16 %v1201, %v1198
      %v1226 = vpack.c.b16 %v1202, %v1199
      %v1227 = vpack.c.b16 %v1203, %v1200
      %1252 = vmatprep.subr.bf16.mxu0 %v1205
      %1253 = vmatpush1.bf16.msra.mxu0 %v1204
      %1254 = vmatprep.subr.bf16.mxu0 %v1208
      %1255 = vmatpush1.bf16.msra.mxu0 %v1207
      %1256 = vmatprep.subr.bf16.mxu0 %v1211
      %1257 = vmatpush1.bf16.msra.mxu0 %v1210
      %1258 = vmatprep.subr.bf16.mxu0 %v1214
      %1259 = vmatpush1.bf16.msra.mxu0 %v1213
      %1260 = vmatprep.subr.bf16.mxu0 %v1217
      %1261 = vmatpush1.bf16.msra.mxu0 %v1216
      %1262 = vmatprep.subr.bf16.mxu0 %v1220
      %1263 = vmatpush1.bf16.msra.mxu0 %v1219
      %1264 = vmatprep.subr.bf16.mxu0 %v1223
      %1265 = vmatpush1.bf16.msra.mxu0 %v1222
      %1266 = vmatprep.subr.bf16.mxu0 %v1226
      %1267 = vmatpush1.bf16.msra.mxu0 %v1225
      %1268 = vmatprep.subr.bf16.mxu0 0
      %1269 = vmatpush1.bf16.msra.mxu0 0
      %1270 = vmatprep.subr.bf16.mxu0 0
      %1271 = vmatpush1.bf16.msra.mxu0 0
      %1272 = vmatprep.subr.bf16.mxu0 0
      %1273 = vmatpush1.bf16.msra.mxu0 0
      %1274 = vmatprep.subr.bf16.mxu0 0
      %1275 = vmatpush1.bf16.msra.mxu0 0
      %1276 = vmatprep.subr.bf16.mxu0 0
      %1277 = vmatpush1.bf16.msra.mxu0 0
      %1278 = vmatprep.subr.bf16.mxu0 0
      %1279 = vmatpush1.bf16.msra.mxu0 0
      %1280 = vmatprep.subr.bf16.mxu0 0
      %1281 = vmatpush1.bf16.msra.mxu0 0
      %1282 = vmatprep.subr.bf16.mxu0 0
      %1283 = vmatpush1.bf16.msra.mxu0 0
      %1284 = vmatprep.mubr.bf16.mxu0 0
      %1285 = vmatmul.mubr.bf16.gmra.mrb[0].mxu0 %v1074
      %v1286 = vpop.f32.mrb[0].mxu0
      %v1287 = vadd.f32 %v1112, %v1286
      %v1288 = vpop.f32.mrb[0].mxu0
      %v1289 = vadd.f32 %v1116, %v1288
      %v1290 = vpop.f32.mrb[0].mxu0
      %v1291 = vadd.f32 %v1112, %v1290
      %v1292 = vpop.f32.mrb[0].mxu0
      %v1293 = vadd.f32 %v1116, %v1292
      %1294 = vdwg.mxu0
      %1295 = vmatprep.subr.bf16.mxu0 0
      %1296 = vmatpush1.bf16.msra.mxu0 %v1206
      %1297 = vmatprep.subr.bf16.mxu0 0
      %1298 = vmatpush1.bf16.msra.mxu0 %v1209
      %1299 = vmatprep.subr.bf16.mxu0 0
      %1300 = vmatpush1.bf16.msra.mxu0 %v1212
      %1301 = vmatprep.subr.bf16.mxu0 0
      %1302 = vmatpush1.bf16.msra.mxu0 %v1215
      %1303 = vmatprep.subr.bf16.mxu0 0
      %1304 = vmatpush1.bf16.msra.mxu0 %v1218
      %1305 = vmatprep.subr.bf16.mxu0 0
      %1306 = vmatpush1.bf16.msra.mxu0 %v1221
      %1307 = vmatprep.subr.bf16.mxu0 0
      %1308 = vmatpush1.bf16.msra.mxu0 %v1224
      %1309 = vmatprep.subr.bf16.mxu0 0
      %1310 = vmatpush1.bf16.msra.mxu0 %v1227
      %1311 = vmatprep.subr.bf16.mxu0 0
      %1312 = vmatpush1.bf16.msra.mxu0 0
      %1313 = vmatprep.subr.bf16.mxu0 0
      %1314 = vmatpush1.bf16.msra.mxu0 0
      %1315 = vmatprep.subr.bf16.mxu0 0
      %1316 = vmatpush1.bf16.msra.mxu0 0
      %1317 = vmatprep.subr.bf16.mxu0 0
      %1318 = vmatpush1.bf16.msra.mxu0 0
      %1319 = vmatprep.subr.bf16.mxu0 0
      %1320 = vmatpush1.bf16.msra.mxu0 0
      %1321 = vmatprep.subr.bf16.mxu0 0
      %1322 = vmatpush1.bf16.msra.mxu0 0
      %1323 = vmatprep.subr.bf16.mxu0 0
      %1324 = vmatpush1.bf16.msra.mxu0 0
      %1325 = vmatprep.subr.bf16.mxu0 0
      %1326 = vmatpush1.bf16.msra.mxu0 0
      %1327 = vmatprep.mubr.bf16.mxu0 0
      %1328 = vmatmul.mubr.bf16.gmra.mrb[0].mxu0 %v1074
      %v1329 = vpop.f32.mrb[0].mxu0
      %v1330 = vadd.f32 %v1120, %v1329
      %v1331 = vpop.f32.mrb[0].mxu0
      %v1332 = vpop.f32.mrb[0].mxu0
      %v1333 = vadd.f32 %v1120, %v1332
      %v1334 = vpop.f32.mrb[0].mxu0
      %1335 = vdwg.mxu0
      %v1336 = vmul.f32 %v1070, %v1070
      %v1337 = vmul.f32 %v1072, %v1072
      %1338 = vadd.xlane.f32.xlu0 %v1336
      %v1339 = vpop.xlane.xlu0 %1338
      %1340 = vadd.xlane.f32.xlu0 %v1337
      %v1341 = vpop.xlane.xlu0 %1340
      %v1342 = vmax.f32 %v1339, 1e-24
      %v1343 = vmax.f32 %v1341, 1e-24
      %v1344 = vrsqrt.pop %v1342
      %v1345 = vrsqrt.pop %v1343
      %v1346 = vmul.f32 %v1070, %v1344
      %v1347 = vmul.f32 %v1072, %v1345
      %1348 = vst [vmem:[#allocation9] sm:$0xff] %v1346
      %1349 = vst [vmem:[#allocation9 + $0x20] sm:$0xff] %v1347
      %v1350 = vmul.f32 %v1287, %v1287
      %v1351 = vmul.f32 %v1291, %v1291
      %1352 = vadd.xlane.f32.xlu0 %v1350
      %v1353 = vpop.xlane.xlu0 %1352
      %1354 = vadd.xlane.f32.xlu0 %v1351
      %v1355 = vpop.xlane.xlu0 %1354
      %v1356 = vmax.f32 %v1353, 1e-24
      %v1357 = vmax.f32 %v1355, 1e-24
      %v1358 = vrsqrt.pop %v1356
      %v1359 = vrsqrt.pop %v1357
      %v1360 = vmul.f32 %v1287, %v1358
      %v1361 = vmul.f32 %v1291, %v1359
      %1362 = vst [vmem:[#allocation9 + $0x8] sm:$0xff] %v1360
      %1363 = vst [vmem:[#allocation9 + $0x28] sm:$0xff] %v1361
      %v1364 = vmul.f32 %v1289, %v1289
      %v1365 = vmul.f32 %v1293, %v1293
      %1366 = vadd.xlane.f32.xlu0 %v1364
      %v1367 = vpop.xlane.xlu0 %1366
      %1368 = vadd.xlane.f32.xlu0 %v1365
      %v1369 = vpop.xlane.xlu0 %1368
      %v1370 = vmax.f32 %v1367, 1e-24
      %v1371 = vmax.f32 %v1369, 1e-24
      %v1372 = vrsqrt.pop %v1370
      %v1373 = vrsqrt.pop %v1371
      %v1374 = vmul.f32 %v1289, %v1372
      %v1375 = vmul.f32 %v1293, %v1373
      %1376 = vst [vmem:[#allocation9 + $0x10] sm:$0xff] %v1374
      %1377 = vst [vmem:[#allocation9 + $0x30] sm:$0xff] %v1375
      %v1378 = vmul.f32 %v1330, %v1330
      %v1379 = vmul.f32 %v1333, %v1333
      %1380 = vadd.xlane.f32.xlu0 %v1378
      %v1381 = vpop.xlane.xlu0 %1380
      %1382 = vadd.xlane.f32.xlu0 %v1379
      %v1383 = vpop.xlane.xlu0 %1382
      %v1384 = vmax.f32 %v1381, 1e-24
      %v1385 = vmax.f32 %v1383, 1e-24
      %v1386 = vrsqrt.pop %v1384
      %v1387 = vrsqrt.pop %v1385
      %v1388 = vmul.f32 %v1330, %v1386
      %v1389 = vmul.f32 %v1333, %v1387
      %1390 = vst [vmem:[#allocation9 + $0x18] sm:$0xff] %v1388
      %1391 = vst [vmem:[#allocation9 + $0x38] sm:$0xff] %v1389
    $region41: #{tpu_custom_call.1} parent=1 // pred_fallthru
      _
    // Predicated region
    $region42: #{tpu_custom_call.1} parent=1 // pred_check
      _
    $region43: #{tpu_custom_call.1} parent=1 // pred_check_branch
      %1393 = sbr.rel (0) target = $region45
    $region44: #{tpu_custom_call.1} parent=1 // pred_region
      %s1395 = ssub.s32 1024, 1024
      %1396 = vsyncadd [#allocation5], %s1395
      %s1397 = sshll.u32 [#allocation9], 4
      %s1398 = int_to_ptr.vmem [resolvable:$true] %s1397
      %1403 = dma.vmem_to_hbm [thread:$0]  %s1398, 1024, %s5, [#allocation5], 512, 512, 32
    $region45: #{tpu_custom_call.1} parent=1 // pred_fallthru
      _
    // Predicated region
    $region46: #{tpu_custom_call.1} parent=1 // pred_check
      _
    $region47: #{tpu_custom_call.1} parent=1 // pred_check_branch
      %1405 = sbr.rel (0) target = $region49
    $region48: #{tpu_custom_call.1} parent=1 // pred_region
      %1406 = dma.done [#allocation5], 1024
    $region49: #{tpu_custom_call.1} parent=1 // pred_fallthru
      _
    %1407 = vsyncpa [#allocation4], 1
    %1408 = vsyncpa [#allocation7], 1
    %1409 = vsyncpa [#allocation5], 1

</llo_original>
